<compile_context>
chip_gen: v7x
topology: tpu7x:2x2x1
jax: 0.10.0
libtpu: 0.0.40
codegen_flags: <defaults>
</compile_context>

<pallas_src>
import jax
import jax.numpy as jnp
from jax.experimental import pallas as pl
from jax.experimental.pallas import tpu as pltpu


def _final_attention_kernel(
    x_ref,      # (BB, T, D)
    wqkv_ref,   # (D, 3H)   [Wq | Wk | Wv]
    bqkv_ref,   # (1, 3H)   [bq + b_in | bk | bv]
    wout_ref,   # (1, H)    W_out weight (row vector)
    v_ref,      # (BB, H)   out: context vectors
    a_ref,      # (BB, T)   out: attention weights (lane-dense)
):
    BB, T, D = x_ref.shape
    H = wout_ref.shape[-1]

    # Fused Q/K/V projection: a single (BB*T, D) @ (D, 3H) MXU matmul.
    x2d = x_ref[...].reshape(BB * T, D)
    qkv = jnp.dot(x2d, wqkv_ref[...],
                  preferred_element_type=jnp.float32) + bqkv_ref[...]
    qkv = qkv.reshape(BB, T, 3 * H)

    q = qkv[:, T - 1:T, 0:H]           # (BB, 1, H)  (bias already includes b_in)
    k = qkv[:, :, H:2 * H]             # (BB, T, H)
    v = qkv[:, :, 2 * H:3 * H]         # (BB, T, H)

    # Additive attention scores.  b_out omitted: softmax is shift-invariant.
    h = jnp.tanh(q + k)                              # (BB, T, H)
    e = jnp.sum(h * wout_ref[...], axis=-1)          # (BB, T), T on lanes

    # Softmax over the time axis (lane axis).
    m = jnp.max(e, axis=-1, keepdims=True)
    p = jnp.exp(e - m)
    a = p * pl.reciprocal(jnp.sum(p, axis=-1, keepdims=True), approx=True)

    # Context vector on the MXU: (BB, 1, T) @ (BB, T, H) -> (BB, 1, H).
    ctx = jnp.einsum("bqt,bth->bqh", a[:, None, :], v,
                     preferred_element_type=jnp.float32)

    v_ref[...] = ctx.reshape(BB, H).astype(v_ref.dtype)
    a_ref[...] = a.astype(a_ref.dtype)


def final_attention_qkv(x, params, *, batch_block=8):
    """x: (B, T, D) float32. Returns (v: (B, H), a: (B, T))."""
    B, T, D = x.shape
    H = params["wq"].shape[1]

    # Pack Q/K/V weights into (D, 3H); fold b_in into the Q bias; drop b_out.
    w_qkv = jnp.concatenate([params["wq"], params["wk"], params["wv"]], axis=1)
    b_qkv = jnp.concatenate(
        [params["bq"] + params["b_in"], params["bk"], params["bv"]]
    ).reshape(1, 3 * H)
    wout = params["wout"].reshape(1, H)

    # Batch blocking: BB batches per grid step; pad B to a multiple of BB.
    BB = min(batch_block, B)
    Bp = ((B + BB - 1) // BB) * BB
    xp = x if Bp == B else jnp.pad(x, ((0, Bp - B), (0, 0), (0, 0)))

    cost = pl.CostEstimate(
        flops=2 * Bp * T * D * 3 * H + 4 * Bp * T * H,
        transcendentals=Bp * T * (H + 1),
        bytes_accessed=4 * (xp.size + w_qkv.size + b_qkv.size + wout.size
                            + Bp * H + Bp * T),
    )

    def full_spec(arr):
        return pl.BlockSpec(arr.shape, lambda b: (0,) * arr.ndim)

    v_out, a_out = pl.pallas_call(
        _final_attention_kernel,
        out_shape=(
            jax.ShapeDtypeStruct((Bp, H), jnp.float32),
            jax.ShapeDtypeStruct((Bp, T), jnp.float32),
        ),
        grid=(Bp // BB,),
        in_specs=[
            pl.BlockSpec((BB, T, D), lambda b: (b, 0, 0)),   # x
            full_spec(w_qkv),
            full_spec(b_qkv),
            full_spec(wout),
        ],
        out_specs=(
            pl.BlockSpec((BB, H), lambda b: (b, 0)),         # context v
            pl.BlockSpec((BB, T), lambda b: (b, 0)),         # attention a (lane-dense)
        ),
        compiler_params=pltpu.CompilerParams(
            dimension_semantics=("parallel",)),
        cost_estimate=cost,
    )(xp, w_qkv, b_qkv, wout)

    return v_out[:B], a_out[:B]


def init_params(key, input_dim, hidden_dim):
    """Deterministic kaiming-uniform-like init for the Linear layers."""
    def uniform(k, shape, fan_in):
        bound = jnp.sqrt(1.0 / fan_in)
        return jax.random.uniform(k, shape, jnp.float32, -bound, bound)

    ks = jax.random.split(key, 9)
    return {
        # Linear weights stored pre-transposed as (D, H): kernel does x @ W.
        "wq": uniform(ks[0], (input_dim, hidden_dim), input_dim),
        "bq": uniform(ks[1], (hidden_dim,), input_dim),
        "wk": uniform(ks[2], (input_dim, hidden_dim), input_dim),
        "bk": uniform(ks[3], (hidden_dim,), input_dim),
        "wv": uniform(ks[4], (input_dim, hidden_dim), input_dim),
        "bv": uniform(ks[5], (hidden_dim,), input_dim),
        "wout": uniform(ks[6], (hidden_dim,), hidden_dim),   # W_out weight (1, H)
        "b_out": uniform(ks[7], (1,), hidden_dim),           # W_out linear bias
        "b_in": uniform(ks[8], (1,), 1.0),                   # nn.Parameter b_in
    }


def reference(x, params):
    """Pure-JAX reference mirroring the PyTorch forward (add attention, eval)."""
    q = x[:, -1, :] @ params["wq"] + params["bq"]               # (B, H)
    k = x @ params["wk"] + params["bk"]                         # (B, T, H)
    v = x @ params["wv"] + params["bv"]                         # (B, T, H)
    h = jnp.tanh(q[:, None, :] + k + params["b_in"][0])
    e = jnp.sum(h * params["wout"][None, None, :], axis=-1) + params["b_out"][0]
    a = jax.nn.softmax(e, axis=1)                               # (B, T)
    vctx = jnp.einsum("bt,bth->bh", a, v)                       # (B, H)
    return vctx, a


if __name__ == "__main__":
    # batch, time_step, attention_input_dim, attention_hidden_dim
    B, T, D, H = 2, 8, 32, 32

    key = jax.random.PRNGKey(0)
    kx, kp = jax.random.split(key)
    x = jax.random.normal(kx, (B, T, D), dtype=jnp.float32)
    params = init_params(kp, D, H)

    v_out, a_out = final_attention_qkv(x, params)
    jax.block_until_ready((v_out, a_out))

    v_ref, a_ref = reference(x, params)
    assert v_out.shape == (B, H) and a_out.shape == (B, T)
    # Tolerance accounts for the EUP approx reciprocal (~2^-12 rel) on the
    # softmax denominator; everything else is f32-exact vs the reference.
    assert jnp.allclose(a_out, a_ref, atol=2e-3, rtol=2e-3)
    assert jnp.allclose(v_out, v_ref, atol=2e-3, rtol=2e-3)

    print("KERNEL_OK")
</pallas_src>

<mosaic_0001>
module attributes {stable_mosaic.version = 11 : i64} {
  func.func @_final_attention_kernel(%arg0: i32, %arg1: memref<2x8x32xf32, #tpu.memory_space<vmem>>, %arg2: memref<32x96xf32, #tpu.memory_space<vmem>>, %arg3: memref<1x96xf32, #tpu.memory_space<vmem>>, %arg4: memref<1x32xf32, #tpu.memory_space<vmem>>, %arg5: memref<2x32xf32, #tpu.memory_space<vmem>>, %arg6: memref<2x8xf32, #tpu.memory_space<vmem>>) attributes {dimension_semantics = [#tpu.dimension_semantics<parallel>], iteration_bounds = array<i64: 1>, scalar_prefetch = 0 : i64, scratch_operands = 0 : i64, tpu.core_type = #tpu.core_type<tc>, window_params = [{transform_indices = @transform_0, window_bounds = array<i64: 2, 8, 32>}, {pipeline_mode = #tpu.pipeline_mode<synchronous>, transform_indices = @transform_1, window_bounds = array<i64: 32, 96>}, {pipeline_mode = #tpu.pipeline_mode<synchronous>, transform_indices = @transform_2, window_bounds = array<i64: 1, 96>}, {pipeline_mode = #tpu.pipeline_mode<synchronous>, transform_indices = @transform_3, window_bounds = array<i64: 1, 32>}, {transform_indices = @transform_4, window_bounds = array<i64: 2, 32>}, {transform_indices = @transform_5, window_bounds = array<i64: 2, 8>}]} {
    %c0 = arith.constant 0 : index
    %c0_0 = arith.constant 0 : index
    %c0_1 = arith.constant 0 : index
    %0 = vector.load %arg1[%c0, %c0_0, %c0_1] : memref<2x8x32xf32, #tpu.memory_space<vmem>>, vector<2x8x32xf32>
    %1 = vector.shape_cast %0 : vector<2x8x32xf32> to vector<16x32xf32>
    %c0_2 = arith.constant 0 : index
    %c0_3 = arith.constant 0 : index
    %2 = vector.load %arg2[%c0_2, %c0_3] : memref<32x96xf32, #tpu.memory_space<vmem>>, vector<32x96xf32>
    %cst = arith.constant dense<0.000000e+00> : vector<16x96xf32>
    %3 = tpu.matmul %1, %2, %cst {dimension_numbers = #tpu.dot_dimension_numbers<[1], [0], [0], [1], [0, 0, 1, 1], [], []>} : vector<16x32xf32>, vector<32x96xf32>, vector<16x96xf32> -> vector<16x96xf32>
    %c0_4 = arith.constant 0 : index
    %c0_5 = arith.constant 0 : index
    %4 = vector.load %arg3[%c0_4, %c0_5] : memref<1x96xf32, #tpu.memory_space<vmem>>, vector<1x96xf32>
    %5 = vector.broadcast %4 : vector<1x96xf32> to vector<16x96xf32>
    %6 = arith.addf %3, %5 : vector<16x96xf32>
    %7 = vector.shape_cast %6 : vector<16x96xf32> to vector<2x8x96xf32>
    %8 = vector.extract_strided_slice %7 {offsets = [0, 7, 0], sizes = [2, 1, 32], strides = [1, 1, 1]} : vector<2x8x96xf32> to vector<2x1x32xf32>
    %9 = vector.extract_strided_slice %7 {offsets = [0, 0, 32], sizes = [2, 8, 32], strides = [1, 1, 1]} : vector<2x8x96xf32> to vector<2x8x32xf32>
    %10 = vector.extract_strided_slice %7 {offsets = [0, 0, 64], sizes = [2, 8, 32], strides = [1, 1, 1]} : vector<2x8x96xf32> to vector<2x8x32xf32>
    %11 = vector.broadcast %8 : vector<2x1x32xf32> to vector<2x8x32xf32>
    %12 = arith.addf %11, %9 : vector<2x8x32xf32>
    %13 = math.tanh %12 : vector<2x8x32xf32>
    %c0_6 = arith.constant 0 : index
    %c0_7 = arith.constant 0 : index
    %14 = vector.load %arg4[%c0_6, %c0_7] : memref<1x32xf32, #tpu.memory_space<vmem>>, vector<1x32xf32>
    %15 = vector.shape_cast %14 : vector<1x32xf32> to vector<1x1x32xf32>
    %16 = vector.broadcast %15 : vector<1x1x32xf32> to vector<2x8x32xf32>
    %17 = arith.mulf %13, %16 : vector<2x8x32xf32>
    %cst_8 = arith.constant dense<0.000000e+00> : vector<2x8xf32>
    %18 = vector.multi_reduction <add>, %17, %cst_8 [2] : vector<2x8x32xf32> to vector<2x8xf32>
    %cst_9 = arith.constant dense<0xFF800000> : vector<2xf32>
    %19 = vector.multi_reduction <maximumf>, %18, %cst_9 [1] : vector<2x8xf32> to vector<2xf32>
    %20 = vector.shape_cast %19 : vector<2xf32> to vector<2x1xf32>
    %21 = vector.broadcast %20 : vector<2x1xf32> to vector<2x8xf32>
    %22 = arith.subf %18, %21 : vector<2x8xf32>
    %23 = math.exp %22 : vector<2x8xf32>
    %cst_10 = arith.constant dense<0.000000e+00> : vector<2xf32>
    %24 = vector.multi_reduction <add>, %23, %cst_10 [1] : vector<2x8xf32> to vector<2xf32>
    %25 = vector.shape_cast %24 : vector<2xf32> to vector<2x1xf32>
    %26 = tpu.reciprocal %25 {approx = true} : vector<2x1xf32> -> vector<2x1xf32>
    %27 = vector.broadcast %26 : vector<2x1xf32> to vector<2x8xf32>
    %28 = arith.mulf %23, %27 : vector<2x8xf32>
    %29 = vector.shape_cast %28 : vector<2x8xf32> to vector<2x1x8xf32>
    "tpu.trace_start"() <{level = 10 : i32, message = "bqt,bth->bqh"}> : () -> ()
    %cst_11 = arith.constant dense<0.000000e+00> : vector<2x1x32xf32>
    %30 = tpu.matmul %29, %10, %cst_11 {dimension_numbers = #tpu.dot_dimension_numbers<[2], [1], [1], [2], [0, 0, 0, 1, 1, 2], [0], [0]>} : vector<2x1x8xf32>, vector<2x8x32xf32>, vector<2x1x32xf32> -> vector<2x1x32xf32>
    "tpu.trace_stop"() : () -> ()
    %31 = vector.shape_cast %30 : vector<2x1x32xf32> to vector<2x32xf32>
    %c0_12 = arith.constant 0 : index
    %c0_13 = arith.constant 0 : index
    %32 = vector.load %arg5[%c0_12, %c0_13] : memref<2x32xf32, #tpu.memory_space<vmem>>, vector<2x32xf32>
    tpu.vector_store %arg5[%c0_12, %c0_13], %31 {strides = array<i32>} : memref<2x32xf32, #tpu.memory_space<vmem>>, vector<2x32xf32>,
    %c0_14 = arith.constant 0 : index
    %c0_15 = arith.constant 0 : index
    %33 = vector.load %arg6[%c0_14, %c0_15] : memref<2x8xf32, #tpu.memory_space<vmem>>, vector<2x8xf32>
    tpu.vector_store %arg6[%c0_14, %c0_15], %28 {strides = array<i32>} : memref<2x8xf32, #tpu.memory_space<vmem>>, vector<2x8xf32>,
    return
  }
  func.func @transform_0(%arg0: i32) -> (i32, i32, i32) {
    %c0_i32 = arith.constant 0 : i32
    %c0_i32_0 = arith.constant 0 : i32
    %c0_i32_1 = arith.constant 0 : i32
    return %arg0, %c0_i32, %c0_i32_0 : i32, i32, i32
  }
  func.func @transform_1(%arg0: i32) -> (i32, i32) {
    %c0_i32 = arith.constant 0 : i32
    %c0_i32_0 = arith.constant 0 : i32
    %c0_i32_1 = arith.constant 0 : i32
    return %c0_i32, %c0_i32_0 : i32, i32
  }
  func.func @transform_2(%arg0: i32) -> (i32, i32) {
    %c0_i32 = arith.constant 0 : i32
    %c0_i32_0 = arith.constant 0 : i32
    %c0_i32_1 = arith.constant 0 : i32
    return %c0_i32, %c0_i32_0 : i32, i32
  }
  func.func @transform_3(%arg0: i32) -> (i32, i32) {
    %c0_i32 = arith.constant 0 : i32
    %c0_i32_0 = arith.constant 0 : i32
    %c0_i32_1 = arith.constant 0 : i32
    return %c0_i32, %c0_i32_0 : i32, i32
  }
  func.func @transform_4(%arg0: i32) -> (i32, i32) {
    %c0_i32 = arith.constant 0 : i32
    %c0_i32_0 = arith.constant 0 : i32
    return %arg0, %c0_i32 : i32, i32
  }
  func.func @transform_5(%arg0: i32) -> (i32, i32) {
    %c0_i32 = arith.constant 0 : i32
    %c0_i32_0 = arith.constant 0 : i32
    return %arg0, %c0_i32 : i32, i32
  }
}

</mosaic_0001>

<llo_original>
// kernel: tpu_custom_call.1
$region0: #{tpu_custom_call.1}
  #allocation0 [shape = 'u32[]', space=smem, size = 0x4, offset = 0x4, fixed_abs, tag = 'smem constant byte address 0x4 - core index']
  #allocation1 [shape = 'u32[144,128]{1,0:T(1,128)}', space=vmem, size = 0x12000, scoped, tag = 'internal scratch']
  %s0 = inlined_call_operand.hbm [shape: f32[2,8,32], index: 0, kind: input, shape index: {}]
  %s1 = inlined_call_operand.hbm [shape: f32[32,96], index: 1, kind: input, shape index: {}]
  %s2 = inlined_call_operand.vmem [shape: f32[1,96], index: 2, kind: input, shape index: {}]
  %s3 = inlined_call_operand.vmem [shape: f32[1,32], index: 3, kind: input, shape index: {}]
  %s4 = inlined_call_operand.hbm [shape: f32[2,32], index: 4, kind: output, shape index: {0}]
  %s5 = inlined_call_operand.hbm [shape: f32[2,8], index: 5, kind: output, shape index: {1}]
  %6 = xla_tuple %s4, %s5
  %s7 = sld [smem:[#allocation0]]
  $region42: #{tpu_custom_call.1} parent=0
    _
  %s9 = ssub.s32 1, %s7
  %s10 = scalar_select 0, %s9, %s7
  $region1: #{tpu_custom_call.1} parent=0
    #allocation2 [shape = 'u8[8192]{0}', space=vmem, size = 0x2000, scoped, tag = 'input window, operand 0, single buffered']
    #allocation3 [shape = 's32[1]{0}', space=sflag, size = 0x4, scoped, tag = 'scoped memory for tpu_custom_call.1']
    #allocation4 [shape = 's32[1]{0}', space=sflag, size = 0x4, scoped, tag = 'scoped memory for tpu_custom_call.1']
    #allocation5 [shape = 'u8[16384]{0}', space=vmem, size = 0x4000, scoped, tag = 'input window, operand 1, single buffered']
    #allocation6 [shape = 's32[1]{0}', space=sflag, size = 0x4, scoped, tag = 'scoped memory for tpu_custom_call.1']
    #allocation7 [shape = 'u8[1024]{0}', space=vmem, size = 0x400, scoped, tag = 'output window, operand 0, single buffered']
    #allocation8 [shape = 'u8[1024]{0}', space=vmem, size = 0x400, scoped, tag = 'output window, operand 1, single buffered']
    #allocation9 [shape = 's32[1]{0}', space=sflag, size = 0x4, scoped, tag = 'scoped memory for tpu_custom_call.1']
    %11 = vsyncpa [#allocation3], 0
    %12 = vsyncpa [#allocation6], 0
    %13 = vsyncpa [#allocation4], 0
    %14 = vsyncpa [#allocation9], 0
    // Predicated region
    $region2: #{tpu_custom_call.1} parent=1 // pred_check
      _
    $region3: #{tpu_custom_call.1} parent=1 // pred_check_branch
      %16 = sbr.rel (0) target = $region5
    $region4: #{tpu_custom_call.1} parent=1 // pred_region
      %s18 = ssub.s32 256, 256
      %19 = vsyncadd [#allocation3], %s18
      %s20 = sshll.u32 [#allocation2], 4
      %s21 = int_to_ptr.vmem [resolvable:$true] %s20
      %26 = dma.hbm_to_vmem [thread:$0]  %s0, 256, %s21, [#allocation3], 128, 128, 8
    $region5: #{tpu_custom_call.1} parent=1 // pred_fallthru
      _
    // Predicated region
    $region6: #{tpu_custom_call.1} parent=1 // pred_check
      _
    $region7: #{tpu_custom_call.1} parent=1 // pred_check_branch
      %28 = sbr.rel (0) target = $region9
    $region8: #{tpu_custom_call.1} parent=1 // pred_region
      %s30 = ssub.s32 512, 512
      %31 = vsyncadd [#allocation6], %s30
      %s32 = sshll.u32 [#allocation5], 4
      %s33 = int_to_ptr.vmem [resolvable:$true] %s32
      %38 = dma.hbm_to_vmem [thread:$0]  %s1, 512, %s33, [#allocation6], 128, 128, 8
    $region9: #{tpu_custom_call.1} parent=1 // pred_fallthru
      _
    // Predicated region
    $region10: #{tpu_custom_call.1} parent=1 // pred_check
      _
    $region11: #{tpu_custom_call.1} parent=1 // pred_check_branch
      %40 = sbr.rel (0) target = $region13
    $region12: #{tpu_custom_call.1} parent=1 // pred_region
      _
    $region13: #{tpu_custom_call.1} parent=1 // pred_fallthru
      _
    // Predicated region
    $region14: #{tpu_custom_call.1} parent=1 // pred_check
      _
    $region15: #{tpu_custom_call.1} parent=1 // pred_check_branch
      %42 = sbr.rel (0) target = $region17
    $region16: #{tpu_custom_call.1} parent=1 // pred_region
      _
    $region17: #{tpu_custom_call.1} parent=1 // pred_fallthru
      _
    // Predicated region
    $region18: #{tpu_custom_call.1} parent=1 // pred_check
      _
    $region19: #{tpu_custom_call.1} parent=1 // pred_check_branch
      %44 = sbr.rel (0) target = $region21
    $region20: #{tpu_custom_call.1} parent=1 // pred_region
      %45 = dma.done [#allocation3], 256
    $region21: #{tpu_custom_call.1} parent=1 // pred_fallthru
      _
    // Predicated region
    $region22: #{tpu_custom_call.1} parent=1 // pred_check
      _
    $region23: #{tpu_custom_call.1} parent=1 // pred_check_branch
      %47 = sbr.rel (0) target = $region25
    $region24: #{tpu_custom_call.1} parent=1 // pred_region
      %48 = dma.done [#allocation6], 512
    $region25: #{tpu_custom_call.1} parent=1 // pred_fallthru
      _
    %v49 = vld [vmem:[#allocation2] sm:$0xff]
    %v50 = vld [vmem:[#allocation2 + $0x8] sm:$0xff]
    %v51 = vld [vmem:[#allocation5] sm:$0xff]
    %v52 = vld [vmem:[#allocation5 + $0x8] sm:$0xff]
    %v53 = vld [vmem:[#allocation5 + $0x10] sm:$0xff]
    %v54 = vld [vmem:[#allocation5 + $0x18] sm:$0xff]
    %v55 = vld [vmem:[%s2] sm:$0x1]
    %v57 = vlaneseq
    %v58 = vshrl.u32 %v57, 7
    %v59 = vsub.s32 0, %v58
    %v60 = vrot.slane %v55, %v59
    %vm62 = vcmask 261120
    %v64 = vsel %vm62, %v49, 0
    %v67 = vsel %vm62, %v50, 0
    %69 = vmatprep.subr.mxu0 0.0
    %70 = vmatpush1.msra.mxu0 %v51
    %71 = vmatprep.subr.mxu0 0.0
    %72 = vmatpush1.msra.mxu0 %v52
    %73 = vmatprep.subr.mxu0 0.0
    %74 = vmatpush1.msra.mxu0 %v53
    %75 = vmatprep.subr.mxu0 0.0
    %76 = vmatpush1.msra.mxu0 %v54
    %77 = vmatprep.subr.mxu0 0.0
    %78 = vmatpush1.msra.mxu0 0.0
    %79 = vmatprep.subr.mxu0 0.0
    %80 = vmatpush1.msra.mxu0 0.0
    %81 = vmatprep.subr.mxu0 0.0
    %82 = vmatpush1.msra.mxu0 0.0
    %83 = vmatprep.subr.mxu0 0.0
    %84 = vmatpush1.msra.mxu0 0.0
    %85 = vmatprep.subr.mxu0 0.0
    %86 = vmatpush1.msra.mxu0 0.0
    %87 = vmatprep.subr.mxu0 0.0
    %88 = vmatpush1.msra.mxu0 0.0
    %89 = vmatprep.subr.mxu0 0.0
    %90 = vmatpush1.msra.mxu0 0.0
    %91 = vmatprep.subr.mxu0 0.0
    %92 = vmatpush1.msra.mxu0 0.0
    %93 = vmatprep.subr.mxu0 0.0
    %94 = vmatpush1.msra.mxu0 0.0
    %95 = vmatprep.subr.mxu0 0.0
    %96 = vmatpush1.msra.mxu0 0.0
    %97 = vmatprep.subr.mxu0 0.0
    %98 = vmatpush1.msra.mxu0 0.0
    %99 = vmatprep.subr.mxu0 0.0
    %100 = vmatpush1.msra.mxu0 0.0
    %101 = vmatprep.subr.mxu0 0.0
    %102 = vmatpush1.msra.mxu0 0.0
    %103 = vmatprep.subr.mxu0 0.0
    %104 = vmatpush1.msra.mxu0 0.0
    %105 = vmatprep.subr.mxu0 0.0
    %106 = vmatpush1.msra.mxu0 0.0
    %107 = vmatprep.subr.mxu0 0.0
    %108 = vmatpush1.msra.mxu0 0.0
    %109 = vmatprep.subr.mxu0 0.0
    %110 = vmatpush1.msra.mxu0 0.0
    %111 = vmatprep.subr.mxu0 0.0
    %112 = vmatpush1.msra.mxu0 0.0
    %113 = vmatprep.subr.mxu0 0.0
    %114 = vmatpush1.msra.mxu0 0.0
    %115 = vmatprep.subr.mxu0 0.0
    %116 = vmatpush1.msra.mxu0 0.0
    %117 = vmatprep.subr.mxu0 0.0
    %118 = vmatpush1.msra.mxu0 0.0
    %119 = vmatprep.subr.mxu0 0.0
    %120 = vmatpush1.msra.mxu0 0.0
    %121 = vmatprep.subr.mxu0 0.0
    %122 = vmatpush1.msra.mxu0 0.0
    %123 = vmatprep.subr.mxu0 0.0
    %124 = vmatpush1.msra.mxu0 0.0
    %125 = vmatprep.subr.mxu0 0.0
    %126 = vmatpush1.msra.mxu0 0.0
    %127 = vmatprep.subr.mxu0 0.0
    %128 = vmatpush1.msra.mxu0 0.0
    %129 = vmatprep.subr.mxu0 0.0
    %130 = vmatpush1.msra.mxu0 0.0
    %131 = vmatprep.subr.mxu0 0.0
    %132 = vmatpush1.msra.mxu0 0.0
    %133 = vmatprep.mubr.f32.mxu0 0.0
    %134 = vmatmul.mubr.f32.gmra.mrb[0].mxu0 %v64
    %v135 = vpop.f32.mrb[0].mxu0
    %v136 = vadd.f32 %v60, %v135
    %v137 = vpop.f32.mrb[0].mxu0
    %138 = vmatprep.mubr.f32.mxu0 0.0
    %139 = vmatmul.mubr.f32.gmra.mrb[0].mxu0 %v67
    %v140 = vpop.f32.mrb[0].mxu0
    %v141 = vadd.f32 %v60, %v140
    %v142 = vpop.f32.mrb[0].mxu0
    %143 = vdwg.mxu0
    %v144 = vlaneseq
    %v145 = vshrl.u32 %v144, 7
    %v146 = vsub.s32 7, %v145
    %v147 = vrot.slane %v136, %v146
    %v148 = vlaneseq
    %v149 = vshrl.u32 %v148, 7
    %v150 = vsub.s32 7, %v149
    %v151 = vrot.slane %v141, %v150
    %154 = vrot.lane.b32.xlu0 %v136, 96
    %v155 = vpop.permute.xlu0 %154
    %156 = vrot.lane.b32.xlu0 %v141, 96
    %v157 = vpop.permute.xlu0 %156
    %v160 = vadd.f32 %v147, %v155
    %v161 = vadd.f32 %v151, %v157
    %v162 = vtanh.pop %v160
    %v163 = vtanh.pop %v161
    %v164 = vld [vmem:[%s3] sm:$0x1]
    %v166 = vlaneseq
    %v167 = vshrl.u32 %v166, 7
    %v168 = vsub.s32 0, %v167
    %v169 = vrot.slane %v164, %v168
    %v171 = vmul.f32 %v162, %v169
    %v172 = vmul.f32 %v163, %v169
    %v173 = vsel %vm62, %v171, 0.0
    %174 = vadd.xlane.f32.xlu0 %v173
    %v175 = vpop.xlane.xlu0 %174
    %v176 = vsel %vm62, %v172, 0.0
    %177 = vadd.xlane.f32.xlu0 %v176
    %v178 = vpop.xlane.xlu0 %177
    %v181 = vlaneseq
    %v182 = vand.u32 %v181, 127
    %v183 = vlaneseq
    %v184 = vshrl.u32 %v183, 7
    %v185 = vsub.s32 %v182, %v184
    %v186 = vrot.slane %v175, %v185
    %v187 = vlaneseq
    %v188 = vshrl.u32 %v187, 7
    %v189 = vsub.s32 %v182, %v188
    %v190 = vrot.slane %v178, %v189
    %vm191 = vcmask 1041409
    %v192 = vsel %vm191, %v190, %v186
    %vm194 = vcmask 58368
    %v195 = vsel %vm194, %v192, -inf
    %196 = vmax.xlane.f32.xlu0 %v195
    %v197 = vpop.xlane.xlu0 %196
    %v199 = vlaneseq
    %v200 = vshrl.u32 %v199, 7
    %v201 = vsub.s32 0, %v200
    %v202 = vrot.slane %v197, %v201
    %v203 = vlaneseq
    %v204 = vshrl.u32 %v203, 7
    %v205 = vsub.s32 1, %v204
    %v206 = vrot.slane %v197, %v205
    %v209 = vsub.f32 %v175, %v202
    %v210 = vsub.f32 %v178, %v206
    %v211 = vmul.f32 %v209, 1.442695
    %v212 = vpow.pop %v211
    %v213 = vmul.f32 %v210, 1.442695
    %v214 = vpow.pop %v213
    %217 = vset.pattern.permute.xlu0 0
    %218 = vperm.xlu0 %217, %v212
    %v219 = vpop.permute.xlu0 %218
    %220 = vset.pattern.permute.xlu0 0
    %221 = vperm.xlu0 %220, %v214
    %v222 = vpop.permute.xlu0 %221
    %v223 = vlaneseq
    %v224 = vshrl.u32 %v223, 7
    %v225 = vsub.s32 %v182, %v224
    %v226 = vrot.slane %v219, %v225
    %v227 = vlaneseq
    %v228 = vshrl.u32 %v227, 7
    %v229 = vsub.s32 %v182, %v228
    %v230 = vrot.slane %v222, %v229
    %v231 = vsel %vm191, %v230, %v226
    %v233 = vsel %vm194, %v231, 0.0
    %234 = vadd.xlane.f32.xlu0 %v233
    %v235 = vpop.xlane.xlu0 %234
    %v236 = vrcp.pop %v235
    %v238 = vlaneseq
    %v239 = vshrl.u32 %v238, 7
    %v240 = vsub.s32 0, %v239
    %v241 = vrot.slane %v236, %v240
    %v242 = vlaneseq
    %v243 = vshrl.u32 %v242, 7
    %v244 = vsub.s32 1, %v243
    %v245 = vrot.slane %v236, %v244
    %v248 = vmul.f32 %v212, %v241
    %v249 = vmul.f32 %v214, %v245
    %251 = vset.pattern.permute.xlu0 0
    %252 = vperm.xlu0 %251, %v248
    %v253 = vpop.permute.xlu0 %252
    %v254 = vlaneseq
    %v255 = vshrl.u32 %v254, 7
    %v256 = vsub.s32 %v182, %v255
    %v257 = vrot.slane %v253, %v256
    %258 = vrot.lane.b32.xlu0 %v136, 64
    %v259 = vpop.permute.xlu0 %258
    %vm261 = vcmask 64512
    %v262 = vsel %vm261, %v257, 0
    %264 = vmatprep.subr.mxu0 0.0
    %265 = vmatpush1.msra.mxu0 %v259
    %266 = vmatprep.subr.mxu0 0.0
    %267 = vmatpush1.msra.mxu0 0.0
    %268 = vmatprep.subr.mxu0 0.0
    %269 = vmatpush1.msra.mxu0 0.0
    %270 = vmatprep.subr.mxu0 0.0
    %271 = vmatpush1.msra.mxu0 0.0
    %272 = vmatprep.subr.mxu0 0.0
    %273 = vmatpush1.msra.mxu0 0.0
    %274 = vmatprep.subr.mxu0 0.0
    %275 = vmatpush1.msra.mxu0 0.0
    %276 = vmatprep.subr.mxu0 0.0
    %277 = vmatpush1.msra.mxu0 0.0
    %278 = vmatprep.subr.mxu0 0.0
    %279 = vmatpush1.msra.mxu0 0.0
    %280 = vmatprep.subr.mxu0 0.0
    %281 = vmatpush1.msra.mxu0 0.0
    %282 = vmatprep.subr.mxu0 0.0
    %283 = vmatpush1.msra.mxu0 0.0
    %284 = vmatprep.subr.mxu0 0.0
    %285 = vmatpush1.msra.mxu0 0.0
    %286 = vmatprep.subr.mxu0 0.0
    %287 = vmatpush1.msra.mxu0 0.0
    %288 = vmatprep.subr.mxu0 0.0
    %289 = vmatpush1.msra.mxu0 0.0
    %290 = vmatprep.subr.mxu0 0.0
    %291 = vmatpush1.msra.mxu0 0.0
    %292 = vmatprep.subr.mxu0 0.0
    %293 = vmatpush1.msra.mxu0 0.0
    %294 = vmatprep.subr.mxu0 0.0
    %295 = vmatpush1.msra.mxu0 0.0
    %296 = vmatprep.subr.mxu0 0.0
    %297 = vmatpush1.msra.mxu0 0.0
    %298 = vmatprep.subr.mxu0 0.0
    %299 = vmatpush1.msra.mxu0 0.0
    %300 = vmatprep.subr.mxu0 0.0
    %301 = vmatpush1.msra.mxu0 0.0
    %302 = vmatprep.subr.mxu0 0.0
    %303 = vmatpush1.msra.mxu0 0.0
    %304 = vmatprep.subr.mxu0 0.0
    %305 = vmatpush1.msra.mxu0 0.0
    %306 = vmatprep.subr.mxu0 0.0
    %307 = vmatpush1.msra.mxu0 0.0
    %308 = vmatprep.subr.mxu0 0.0
    %309 = vmatpush1.msra.mxu0 0.0
    %310 = vmatprep.subr.mxu0 0.0
    %311 = vmatpush1.msra.mxu0 0.0
    %312 = vmatprep.subr.mxu0 0.0
    %313 = vmatpush1.msra.mxu0 0.0
    %314 = vmatprep.subr.mxu0 0.0
    %315 = vmatpush1.msra.mxu0 0.0
    %316 = vmatprep.subr.mxu0 0.0
    %317 = vmatpush1.msra.mxu0 0.0
    %318 = vmatprep.subr.mxu0 0.0
    %319 = vmatpush1.msra.mxu0 0.0
    %320 = vmatprep.subr.mxu0 0.0
    %321 = vmatpush1.msra.mxu0 0.0
    %322 = vmatprep.subr.mxu0 0.0
    %323 = vmatpush1.msra.mxu0 0.0
    %324 = vmatprep.subr.mxu0 0.0
    %325 = vmatpush1.msra.mxu0 0.0
    %326 = vmatprep.subr.mxu0 0.0
    %327 = vmatpush1.msra.mxu0 0.0
    %328 = vmatprep.mubr.f32.mxu0 0.0
    %329 = vmatmul.mubr.f32.gmra.mrb[0].mxu0 %v262
    %v330 = vpop.f32.mrb[0].mxu0
    %v331 = vadd.f32 0.0, %v330
    %v332 = vpop.f32.mrb[0].mxu0
    %333 = vdwg.mxu0
    %335 = vset.pattern.permute.xlu0 0
    %336 = vperm.xlu0 %335, %v249
    %v337 = vpop.permute.xlu0 %336
    %v338 = vlaneseq
    %v339 = vshrl.u32 %v338, 7
    %v340 = vsub.s32 %v182, %v339
    %v341 = vrot.slane %v337, %v340
    %342 = vrot.lane.b32.xlu0 %v141, 64
    %v343 = vpop.permute.xlu0 %342
    %v345 = vsel %vm261, %v341, 0
    %347 = vmatprep.subr.mxu0 0.0
    %348 = vmatpush1.msra.mxu0 %v343
    %349 = vmatprep.subr.mxu0 0.0
    %350 = vmatpush1.msra.mxu0 0.0
    %351 = vmatprep.subr.mxu0 0.0
    %352 = vmatpush1.msra.mxu0 0.0
    %353 = vmatprep.subr.mxu0 0.0
    %354 = vmatpush1.msra.mxu0 0.0
    %355 = vmatprep.subr.mxu0 0.0
    %356 = vmatpush1.msra.mxu0 0.0
    %357 = vmatprep.subr.mxu0 0.0
    %358 = vmatpush1.msra.mxu0 0.0
    %359 = vmatprep.subr.mxu0 0.0
    %360 = vmatpush1.msra.mxu0 0.0
    %361 = vmatprep.subr.mxu0 0.0
    %362 = vmatpush1.msra.mxu0 0.0
    %363 = vmatprep.subr.mxu0 0.0
    %364 = vmatpush1.msra.mxu0 0.0
    %365 = vmatprep.subr.mxu0 0.0
    %366 = vmatpush1.msra.mxu0 0.0
    %367 = vmatprep.subr.mxu0 0.0
    %368 = vmatpush1.msra.mxu0 0.0
    %369 = vmatprep.subr.mxu0 0.0
    %370 = vmatpush1.msra.mxu0 0.0
    %371 = vmatprep.subr.mxu0 0.0
    %372 = vmatpush1.msra.mxu0 0.0
    %373 = vmatprep.subr.mxu0 0.0
    %374 = vmatpush1.msra.mxu0 0.0
    %375 = vmatprep.subr.mxu0 0.0
    %376 = vmatpush1.msra.mxu0 0.0
    %377 = vmatprep.subr.mxu0 0.0
    %378 = vmatpush1.msra.mxu0 0.0
    %379 = vmatprep.subr.mxu0 0.0
    %380 = vmatpush1.msra.mxu0 0.0
    %381 = vmatprep.subr.mxu0 0.0
    %382 = vmatpush1.msra.mxu0 0.0
    %383 = vmatprep.subr.mxu0 0.0
    %384 = vmatpush1.msra.mxu0 0.0
    %385 = vmatprep.subr.mxu0 0.0
    %386 = vmatpush1.msra.mxu0 0.0
    %387 = vmatprep.subr.mxu0 0.0
    %388 = vmatpush1.msra.mxu0 0.0
    %389 = vmatprep.subr.mxu0 0.0
    %390 = vmatpush1.msra.mxu0 0.0
    %391 = vmatprep.subr.mxu0 0.0
    %392 = vmatpush1.msra.mxu0 0.0
    %393 = vmatprep.subr.mxu0 0.0
    %394 = vmatpush1.msra.mxu0 0.0
    %395 = vmatprep.subr.mxu0 0.0
    %396 = vmatpush1.msra.mxu0 0.0
    %397 = vmatprep.subr.mxu0 0.0
    %398 = vmatpush1.msra.mxu0 0.0
    %399 = vmatprep.subr.mxu0 0.0
    %400 = vmatpush1.msra.mxu0 0.0
    %401 = vmatprep.subr.mxu0 0.0
    %402 = vmatpush1.msra.mxu0 0.0
    %403 = vmatprep.subr.mxu0 0.0
    %404 = vmatpush1.msra.mxu0 0.0
    %405 = vmatprep.subr.mxu0 0.0
    %406 = vmatpush1.msra.mxu0 0.0
    %407 = vmatprep.subr.mxu0 0.0
    %408 = vmatpush1.msra.mxu0 0.0
    %409 = vmatprep.subr.mxu0 0.0
    %410 = vmatpush1.msra.mxu0 0.0
    %411 = vmatprep.mubr.f32.mxu0 0.0
    %412 = vmatmul.mubr.f32.gmra.mrb[0].mxu0 %v345
    %v413 = vpop.f32.mrb[0].mxu0
    %v414 = vadd.f32 0.0, %v413
    %v415 = vpop.f32.mrb[0].mxu0
    %416 = vdwg.mxu0
    %v419 = vrot.slane %v414, 7
    %v420 = vsel %vm191, %v419, %v331
    %vm422 = vcmask 254976
    %423 = vst.msk [vmem:[#allocation7] sm:$0x3] %vm422, %v420
    %v424 = vsel %vm191, %v341, %v257
    %426 = vst.msk [vmem:[#allocation8] sm:$0x3] %vm194, %v424
    // Predicated region
    $region26: #{tpu_custom_call.1} parent=1 // pred_check
      _
    $region27: #{tpu_custom_call.1} parent=1 // pred_check_branch
      %428 = sbr.rel (0) target = $region29
    $region28: #{tpu_custom_call.1} parent=1 // pred_region
      %s430 = ssub.s32 32, 32
      %431 = vsyncadd [#allocation4], %s430
      %s433 = sshll.u32 [#allocation7], 4
      %s434 = int_to_ptr.vmem [resolvable:$true] %s433
      %436 = dma.vmem_to_hbm [thread:$0]  %s434, 32, %s4, [#allocation4]
    $region29: #{tpu_custom_call.1} parent=1 // pred_fallthru
      _
    // Predicated region
    $region30: #{tpu_custom_call.1} parent=1 // pred_check
      _
    $region31: #{tpu_custom_call.1} parent=1 // pred_check_branch
      %438 = sbr.rel (0) target = $region33
    $region32: #{tpu_custom_call.1} parent=1 // pred_region
      %s440 = ssub.s32 32, 32
      %441 = vsyncadd [#allocation9], %s440
      %s443 = sshll.u32 [#allocation8], 4
      %s444 = int_to_ptr.vmem [resolvable:$true] %s443
      %446 = dma.vmem_to_hbm [thread:$0]  %s444, 32, %s5, [#allocation9]
    $region33: #{tpu_custom_call.1} parent=1 // pred_fallthru
      _
    // Predicated region
    $region34: #{tpu_custom_call.1} parent=1 // pred_check
      _
    $region35: #{tpu_custom_call.1} parent=1 // pred_check_branch
      %448 = sbr.rel (0) target = $region37
    $region36: #{tpu_custom_call.1} parent=1 // pred_region
      %449 = dma.done [#allocation4], 32
    $region37: #{tpu_custom_call.1} parent=1 // pred_fallthru
      _
    // Predicated region
    $region38: #{tpu_custom_call.1} parent=1 // pred_check
      _
    $region39: #{tpu_custom_call.1} parent=1 // pred_check_branch
      %451 = sbr.rel (0) target = $region41
    $region40: #{tpu_custom_call.1} parent=1 // pred_region
      %452 = dma.done [#allocation9], 32
    $region41: #{tpu_custom_call.1} parent=1 // pred_fallthru
      _
    %453 = vsyncpa [#allocation3], 1
    %454 = vsyncpa [#allocation6], 1
    %455 = vsyncpa [#allocation4], 1
    %456 = vsyncpa [#allocation9], 1

</llo_original>
